<compile_context>
chip_gen: v6e
topology: v6e:2x2x1
jax: 0.10.0
libtpu: 0.0.40
codegen_flags: <defaults>
</compile_context>

<pallas_src>
import functools

import jax
import jax.numpy as jnp
from jax import lax
from jax.experimental import pallas as pl
from jax.experimental.pallas import tpu as pltpu

_LN_EPS = 1e-5
_BANDED_MAX_C = 32        # use banded lane-dense conv when max(Cin, Cout) <= this
_BANDED_MAX_LANE = 1024   # ... and W*C (lane width of the slabs) stays bounded


# --------------------------------------------------------------------------- #
# Wrapper-side weight preprocessing
# --------------------------------------------------------------------------- #
def _banded_conv_weight(w_oihw, W):
    """(Cout, Cin, 3, 3) torch conv weight -> (3, W*Cin, W*Cout) banded slabs.

    bw[kh][(w+dw)*Cin + c, w*Cout + o] = w[o, c, kh, dw+1]  for w+dw in [0, W)
    so  pad_row[h+kh] (shape (., W*Cin)) @ bw[kh]  accumulates the whole kh row
    of the stencil; the W-edge zero padding is the zero off-band of the matrix.
    """
    w_oihw = w_oihw.astype(jnp.float32)
    bands = []
    for kh in range(3):
        acc = None
        for kw in range(3):
            dw = kw - 1
            # shift[i, j] = 1 iff i == j + dw   (input w-block i feeds output w-block j)
            shift = jnp.eye(W, k=-dw, dtype=jnp.float32)
            tap = jnp.transpose(w_oihw[:, :, kh, kw])          # (Cin, Cout)
            blk = jnp.kron(shift, tap)                         # (W*Cin, W*Cout)
            acc = blk if acc is None else acc + blk
        bands.append(acc)
    return jnp.stack(bands, axis=0)                            # (3, W*Cin, W*Cout)


def _vmem_estimate_bytes(nb, H, W, Cin, Cout, banded, normalize):
    Lin, Lout = W * Cin, W * Cout
    f32 = 4
    io_blocks = nb * H * (Lin + Lout) * f32                    # x block + out block
    if banded:
        scratch = nb * (H + 2) * (Lin + Lout) * f32
        weights = (3 * (Lin * Lout + Lout * Lout) + 2 * Lout) * f32
    else:
        scratch = nb * (H + 2) * (W + 2) * (Cin + Cout) * f32
        weights = (9 * (Cin * Cout + Cout * Cout) + 2 * Cout) * f32
    ln = 2 * H * Lin * f32 if normalize else 0
    # pipelined operands are double-buffered by default; scratch is not.
    return 2 * (io_blocks + weights + ln) + scratch


def _pick_batch_block(N, H, W, Cin, Cout, banded, normalize, budget=8 << 20):
    """Largest divisor of N whose per-step footprint fits the budget."""
    for nb in range(N, 0, -1):
        if N % nb == 0 and _vmem_estimate_bytes(nb, H, W, Cin, Cout, banded,
                                                normalize) <= budget:
            return nb
    return 1


# --------------------------------------------------------------------------- #
# Kernel
# --------------------------------------------------------------------------- #
def _double_conv_kernel(*refs, nb, H, W, Cin, Cout, normalize, banded, mxu_dtype):
    if normalize:
        (x_ref, g_ref, b_ref, w1_ref, b1_ref, w2_ref, b2_ref,
         o_ref, pad1_ref, pad2_ref) = refs
    else:
        (x_ref, w1_ref, b1_ref, w2_ref, b2_ref,
         o_ref, pad1_ref, pad2_ref) = refs
        g_ref = b_ref = None

    Lin, Lout = W * Cin, W * Cout

    # ---- LayerNorm over (C,H,W) per sample, on the lane-dense (nb,H,W*Cin) view.
    x = x_ref[...].astype(jnp.float32)                     # (nb, H, W*Cin)
    if normalize:
        d = jnp.float32(H * Lin)
        row_sum = jnp.sum(x, axis=2, keepdims=True)        # lane reduce  (nb,H,1)
        mean = jnp.sum(row_sum, axis=1, keepdims=True) / d # (nb,1,1)
        cen = x - mean
        row_sq = jnp.sum(cen * cen, axis=2, keepdims=True)
        var = jnp.sum(row_sq, axis=1, keepdims=True) / d   # biased var (torch)
        x = cen * lax.rsqrt(var + _LN_EPS)
        x = x * g_ref[...].astype(jnp.float32) + b_ref[...].astype(jnp.float32)

    def banded_conv_silu(pad_ref, x_in, w_ref, bias_ref, li, lo):
        # x_in: (nb, H, li); pad_ref: (nb, H+2, li); w_ref: (3, li, lo).
        zrow = jnp.zeros((nb, 1, li), jnp.float32)
        pad_ref[:, 0:1, :] = zrow                  # zero only the 1-row halo;
        pad_ref[:, H + 1:H + 2, :] = zrow          # interior fully rewritten below
        pad_ref[:, 1:H + 1, :] = x_in
        acc = jnp.zeros((nb * H, lo), jnp.float32)
        for kh in range(3):                        # 3 accumulated matmuls / conv
            slab = pad_ref[:, kh:kh + H, :].reshape(nb * H, li)
            acc = acc + jnp.dot(slab.astype(mxu_dtype), w_ref[kh],
                                preferred_element_type=jnp.float32)
        acc = acc + bias_ref[...].astype(jnp.float32)
        return acc * jax.nn.sigmoid(acc)           # SiLU, (nb*H, lo)

    def pertap_conv_silu(pad_ref, x_in, w_ref, bias_ref, ci, co):
        # Large-C path: x_in (nb,H,W,ci); pad_ref (nb,H+2,W+2,ci); w_ref (9,ci,co).
        pad_ref[:, 0:1, :, :] = jnp.zeros((nb, 1, W + 2, ci), jnp.float32)
        pad_ref[:, H + 1:H + 2, :, :] = jnp.zeros((nb, 1, W + 2, ci), jnp.float32)
        pad_ref[:, :, 0:1, :] = jnp.zeros((nb, H + 2, 1, ci), jnp.float32)
        pad_ref[:, :, W + 1:W + 2, :] = jnp.zeros((nb, H + 2, 1, ci), jnp.float32)
        pad_ref[:, 1:H + 1, 1:W + 1, :] = x_in
        acc = jnp.zeros((nb * H * W, co), jnp.float32)
        for kh in range(3):                        # 9 accumulated tap matmuls
            for kw in range(3):
                tap = pad_ref[:, kh:kh + H, kw:kw + W, :].reshape(nb * H * W, ci)
                acc = acc + jnp.dot(tap.astype(mxu_dtype), w_ref[kh * 3 + kw],
                                    preferred_element_type=jnp.float32)
        acc = acc + bias_ref[...].astype(jnp.float32)
        return acc * jax.nn.sigmoid(acc)           # (nb*H*W, co)

    if banded:
        h1 = banded_conv_silu(pad1_ref, x, w1_ref, b1_ref, Lin, Lout)
        h2 = banded_conv_silu(pad2_ref, h1.reshape(nb, H, Lout),
                              w2_ref, b2_ref, Lout, Lout)
        o_ref[...] = h2.reshape(nb, H, Lout).astype(o_ref.dtype)   # lane-dense store
    else:
        h1 = pertap_conv_silu(pad1_ref, x.reshape(nb, H, W, Cin),
                              w1_ref, b1_ref, Cin, Cout)
        h2 = pertap_conv_silu(pad2_ref, h1.reshape(nb, H, W, Cout),
                              w2_ref, b2_ref, Cout, Cout)
        # Cout is large here -> already lane-dense, no final repack.
        o_ref[...] = h2.reshape(nb, H * W, Cout).astype(o_ref.dtype)


# --------------------------------------------------------------------------- #
# Wrapper
# --------------------------------------------------------------------------- #
def double_conv_forward(x_nchw, params, normalize=True, matmul_dtype=jnp.float32):
    """PyTorch-equivalent DoubleConv forward. x_nchw: (N, Cin, H, W)."""
    N, Cin, H, W = x_nchw.shape
    Cout = params["w1"].shape[0]
    Lin, Lout = W * Cin, W * Cout

    banded = (max(Cin, Cout) <= _BANDED_MAX_C and max(Lin, Lout) <= _BANDED_MAX_LANE)
    nb = _pick_batch_block(N, H, W, Cin, Cout, banded, normalize)
    grid = (N // nb,)

    # NCHW -> lane-dense (N, H, W*Cin) once at the module boundary (free reshape).
    x = jnp.transpose(x_nchw, (0, 2, 3, 1)).reshape(N, H, Lin)

    args = [x]
    in_specs = [pl.BlockSpec((nb, H, Lin), lambda n: (n, 0, 0))]

    if normalize:
        g = jnp.transpose(params["ln_w"], (1, 2, 0)).reshape(H, Lin)
        b = jnp.transpose(params["ln_b"], (1, 2, 0)).reshape(H, Lin)
        args += [g, b]
        in_specs += [pl.BlockSpec((H, Lin), lambda n: (0, 0)),
                     pl.BlockSpec((H, Lin), lambda n: (0, 0))]

    if banded:
        w1 = _banded_conv_weight(params["w1"], W).astype(matmul_dtype)  # (3,Lin,Lout)
        w2 = _banded_conv_weight(params["w2"], W).astype(matmul_dtype)  # (3,Lout,Lout)
        b1 = jnp.tile(params["b1"].astype(jnp.float32), W).reshape(1, Lout)
        b2 = jnp.tile(params["b2"].astype(jnp.float32), W).reshape(1, Lout)
        in_specs += [pl.BlockSpec((3, Lin, Lout), lambda n: (0, 0, 0)),
                     pl.BlockSpec((1, Lout), lambda n: (0, 0)),
                     pl.BlockSpec((3, Lout, Lout), lambda n: (0, 0, 0)),
                     pl.BlockSpec((1, Lout), lambda n: (0, 0))]
        out_shape = jax.ShapeDtypeStruct((N, H, Lout), x.dtype)
        out_spec = pl.BlockSpec((nb, H, Lout), lambda n: (n, 0, 0))
        scratch = [pltpu.VMEM((nb, H + 2, Lin), jnp.float32),   # LN out (+H halo)
                   pltpu.VMEM((nb, H + 2, Lout), jnp.float32)]  # conv1 out (+H halo)
    else:
        w1 = jnp.transpose(params["w1"], (2, 3, 1, 0)).reshape(9, Cin, Cout)
        w2 = jnp.transpose(params["w2"], (2, 3, 1, 0)).reshape(9, Cout, Cout)
        w1, w2 = w1.astype(matmul_dtype), w2.astype(matmul_dtype)
        b1 = params["b1"].astype(jnp.float32).reshape(1, Cout)
        b2 = params["b2"].astype(jnp.float32).reshape(1, Cout)
        in_specs += [pl.BlockSpec((9, Cin, Cout), lambda n: (0, 0, 0)),
                     pl.BlockSpec((1, Cout), lambda n: (0, 0)),
                     pl.BlockSpec((9, Cout, Cout), lambda n: (0, 0, 0)),
                     pl.BlockSpec((1, Cout), lambda n: (0, 0))]
        out_shape = jax.ShapeDtypeStruct((N, H * W, Cout), x.dtype)
        out_spec = pl.BlockSpec((nb, H * W, Cout), lambda n: (n, 0, 0))
        scratch = [pltpu.VMEM((nb, H + 2, W + 2, Cin), jnp.float32),
                   pltpu.VMEM((nb, H + 2, W + 2, Cout), jnp.float32)]

    args += [w1, b1, w2, b2]

    est = _vmem_estimate_bytes(nb, H, W, Cin, Cout, banded, normalize)
    vmem_limit = int(min(max(4 * est, 32 << 20), 64 << 20))   # valid on v5e..v7x

    kern = functools.partial(_double_conv_kernel, nb=nb, H=H, W=W, Cin=Cin,
                             Cout=Cout, normalize=normalize, banded=banded,
                             mxu_dtype=matmul_dtype)

    out = pl.pallas_call(
        kern,
        out_shape=out_shape,
        grid_spec=pltpu.PrefetchScalarGridSpec(
            num_scalar_prefetch=0,
            grid=grid,
            in_specs=in_specs,
            out_specs=out_spec,
            scratch_shapes=scratch),
        compiler_params=pltpu.CompilerParams(
            dimension_semantics=("parallel",),
            vmem_limit_bytes=vmem_limit),
    )(*args)

    out = out.reshape(N, H, W, Cout)
    return jnp.transpose(out, (0, 3, 1, 2))       # NHWC -> NCHW


# --------------------------------------------------------------------------- #
# Pure-JAX reference (mirrors the PyTorch module) + params
# --------------------------------------------------------------------------- #
def _double_conv_reference(x_nchw, params, normalize=True):
    x = x_nchw.astype(jnp.float32)
    if normalize:
        mean = jnp.mean(x, axis=(1, 2, 3), keepdims=True)
        var = jnp.mean(jnp.square(x - mean), axis=(1, 2, 3), keepdims=True)
        x = (x - mean) / jnp.sqrt(var + _LN_EPS)
        x = x * params["ln_w"][None] + params["ln_b"][None]

    def conv(h, w, b):
        y = lax.conv_general_dilated(h, w, window_strides=(1, 1),
                                     padding=((1, 1), (1, 1)),
                                     dimension_numbers=("NCHW", "OIHW", "NCHW"),
                                     precision=lax.Precision.HIGHEST)
        return y + b[None, :, None, None]

    x = conv(x, params["w1"], params["b1"]); x = x * jax.nn.sigmoid(x)
    x = conv(x, params["w2"], params["b2"]); x = x * jax.nn.sigmoid(x)
    return x


def init_params(key, shape, in_c, out_c):
    C, H, W = shape
    k1, k2, k3, k4, k5, k6 = jax.random.split(key, 6)
    # LayerNorm affine: perturbed from the PyTorch default so the path is exercised.
    ln_w = 1.0 + 0.1 * jax.random.normal(k5, (C, H, W), jnp.float32)
    ln_b = 0.05 * jax.random.normal(k6, (C, H, W), jnp.float32)
    s1 = 1.0 / jnp.sqrt(in_c * 9.0)
    s2 = 1.0 / jnp.sqrt(out_c * 9.0)
    w1 = jax.random.uniform(k1, (out_c, in_c, 3, 3), jnp.float32, -s1, s1)
    b1 = jax.random.uniform(k2, (out_c,), jnp.float32, -s1, s1)
    w2 = jax.random.uniform(k3, (out_c, out_c, 3, 3), jnp.float32, -s2, s2)
    b2 = jax.random.uniform(k4, (out_c,), jnp.float32, -s2, s2)
    return dict(ln_w=ln_w, ln_b=ln_b, w1=w1, b1=b1, w2=w2, b2=b2)


if __name__ == "__main__":
    N, in_c, H, W = 2, 4, 16, 16
    out_c = 8
    key = jax.random.PRNGKey(0)
    kx, kp = jax.random.split(key)
    x = jax.random.normal(kx, (N, in_c, H, W), jnp.float32)
    params = init_params(kp, (in_c, H, W), in_c, out_c)

    y = double_conv_forward(x, params, normalize=True)
    y = jax.block_until_ready(y)
    assert y.shape == (N, out_c, H, W), y.shape

    y_ref = jax.block_until_ready(_double_conv_reference(x, params, normalize=True))
    err = float(jnp.max(jnp.abs(y - y_ref)))
    assert err < 2e-3, f"kernel/reference mismatch: max abs err = {err}"

    print("KERNEL_OK")
</pallas_src>

<mosaic_0001>
module attributes {stable_mosaic.version = 11 : i64} {
  func.func @_double_conv_kernel(%arg0: i32, %arg1: memref<2x16x64xf32, #tpu.memory_space<vmem>>, %arg2: memref<16x64xf32, #tpu.memory_space<vmem>>, %arg3: memref<16x64xf32, #tpu.memory_space<vmem>>, %arg4: memref<3x64x128xf32, #tpu.memory_space<vmem>>, %arg5: memref<1x128xf32, #tpu.memory_space<vmem>>, %arg6: memref<3x128x128xf32, #tpu.memory_space<vmem>>, %arg7: memref<1x128xf32, #tpu.memory_space<vmem>>, %arg8: memref<2x16x128xf32, #tpu.memory_space<vmem>>, %arg9: memref<2x18x64xf32, #tpu.memory_space<vmem>>, %arg10: memref<2x18x128xf32, #tpu.memory_space<vmem>>) attributes {dimension_semantics = [#tpu.dimension_semantics<parallel>], iteration_bounds = array<i64: 1>, scalar_prefetch = 0 : i64, scratch_operands = 2 : i64, tpu.core_type = #tpu.core_type<tc>, window_params = [{transform_indices = @transform_0, window_bounds = array<i64: 2, 16, 64>}, {pipeline_mode = #tpu.pipeline_mode<synchronous>, transform_indices = @transform_1, window_bounds = array<i64: 16, 64>}, {pipeline_mode = #tpu.pipeline_mode<synchronous>, transform_indices = @transform_2, window_bounds = array<i64: 16, 64>}, {pipeline_mode = #tpu.pipeline_mode<synchronous>, transform_indices = @transform_3, window_bounds = array<i64: 3, 64, 128>}, {pipeline_mode = #tpu.pipeline_mode<synchronous>, transform_indices = @transform_4, window_bounds = array<i64: 1, 128>}, {pipeline_mode = #tpu.pipeline_mode<synchronous>, transform_indices = @transform_5, window_bounds = array<i64: 3, 128, 128>}, {pipeline_mode = #tpu.pipeline_mode<synchronous>, transform_indices = @transform_6, window_bounds = array<i64: 1, 128>}, {transform_indices = @transform_7, window_bounds = array<i64: 2, 16, 128>}]} {
    %c0 = arith.constant 0 : index
    %c0_0 = arith.constant 0 : index
    %c0_1 = arith.constant 0 : index
    %0 = vector.load %arg1[%c0, %c0_0, %c0_1] : memref<2x16x64xf32, #tpu.memory_space<vmem>>, vector<2x16x64xf32>
    %cst = arith.constant dense<0.000000e+00> : vector<2x16xf32>
    %1 = vector.multi_reduction <add>, %0, %cst [2] : vector<2x16x64xf32> to vector<2x16xf32>
    %2 = vector.shape_cast %1 : vector<2x16xf32> to vector<2x16x1xf32>
    %cst_2 = arith.constant dense<0.000000e+00> : vector<2x1xf32>
    %3 = vector.multi_reduction <add>, %2, %cst_2 [1] : vector<2x16x1xf32> to vector<2x1xf32>
    %4 = vector.shape_cast %3 : vector<2x1xf32> to vector<2x1x1xf32>
    %cst_3 = arith.constant 1.024000e+03 : f32
    %5 = vector.broadcast %cst_3 : f32 to vector<2x1x1xf32>
    %6 = arith.divf %4, %5 : vector<2x1x1xf32>
    %7 = vector.broadcast %6 : vector<2x1x1xf32> to vector<2x16x64xf32>
    %8 = arith.subf %0, %7 : vector<2x16x64xf32>
    %9 = arith.mulf %8, %8 : vector<2x16x64xf32>
    %cst_4 = arith.constant dense<0.000000e+00> : vector<2x16xf32>
    %10 = vector.multi_reduction <add>, %9, %cst_4 [2] : vector<2x16x64xf32> to vector<2x16xf32>
    %11 = vector.shape_cast %10 : vector<2x16xf32> to vector<2x16x1xf32>
    %cst_5 = arith.constant dense<0.000000e+00> : vector<2x1xf32>
    %12 = vector.multi_reduction <add>, %11, %cst_5 [1] : vector<2x16x1xf32> to vector<2x1xf32>
    %13 = vector.shape_cast %12 : vector<2x1xf32> to vector<2x1x1xf32>
    %cst_6 = arith.constant 1.024000e+03 : f32
    %14 = vector.broadcast %cst_6 : f32 to vector<2x1x1xf32>
    %15 = arith.divf %13, %14 : vector<2x1x1xf32>
    %cst_7 = arith.constant 9.99999974E-6 : f32
    %16 = vector.broadcast %cst_7 : f32 to vector<2x1x1xf32>
    %17 = arith.addf %15, %16 : vector<2x1x1xf32>
    %18 = math.rsqrt %17 : vector<2x1x1xf32>
    %19 = vector.broadcast %18 : vector<2x1x1xf32> to vector<2x16x64xf32>
    %20 = arith.mulf %8, %19 : vector<2x16x64xf32>
    %c0_8 = arith.constant 0 : index
    %c0_9 = arith.constant 0 : index
    %21 = vector.load %arg2[%c0_8, %c0_9] : memref<16x64xf32, #tpu.memory_space<vmem>>, vector<16x64xf32>
    %22 = vector.shape_cast %21 : vector<16x64xf32> to vector<1x16x64xf32>
    %23 = vector.broadcast %22 : vector<1x16x64xf32> to vector<2x16x64xf32>
    %24 = arith.mulf %20, %23 : vector<2x16x64xf32>
    %c0_10 = arith.constant 0 : index
    %c0_11 = arith.constant 0 : index
    %25 = vector.load %arg3[%c0_10, %c0_11] : memref<16x64xf32, #tpu.memory_space<vmem>>, vector<16x64xf32>
    %26 = vector.shape_cast %25 : vector<16x64xf32> to vector<1x16x64xf32>
    %27 = vector.broadcast %26 : vector<1x16x64xf32> to vector<2x16x64xf32>
    %28 = arith.addf %24, %27 : vector<2x16x64xf32>
    %cst_12 = arith.constant 0.000000e+00 : f32
    %29 = vector.broadcast %cst_12 : f32 to vector<2x1x64xf32>
    %c0_13 = arith.constant 0 : index
    %c0_14 = arith.constant 0 : index
    %c0_15 = arith.constant 0 : index
    %30 = vector.load %arg9[%c0_13, %c0_14, %c0_15] : memref<2x18x64xf32, #tpu.memory_space<vmem>>, vector<2x1x64xf32>
    tpu.vector_store %arg9[%c0_13, %c0_14, %c0_15], %29 {strides = array<i32>} : memref<2x18x64xf32, #tpu.memory_space<vmem>>, vector<2x1x64xf32>,
    %c0_16 = arith.constant 0 : index
    %c17 = arith.constant 17 : index
    %c0_17 = arith.constant 0 : index
    %31 = vector.load %arg9[%c0_16, %c17, %c0_17] : memref<2x18x64xf32, #tpu.memory_space<vmem>>, vector<2x1x64xf32>
    tpu.vector_store %arg9[%c0_16, %c17, %c0_17], %29 {strides = array<i32>} : memref<2x18x64xf32, #tpu.memory_space<vmem>>, vector<2x1x64xf32>,
    %c0_18 = arith.constant 0 : index
    %c1 = arith.constant 1 : index
    %c0_19 = arith.constant 0 : index
    %32 = vector.load %arg9[%c0_18, %c1, %c0_19] : memref<2x18x64xf32, #tpu.memory_space<vmem>>, vector<2x16x64xf32>
    tpu.vector_store %arg9[%c0_18, %c1, %c0_19], %28 {strides = array<i32>} : memref<2x18x64xf32, #tpu.memory_space<vmem>>, vector<2x16x64xf32>,
    %cst_20 = arith.constant 0.000000e+00 : f32
    %33 = vector.broadcast %cst_20 : f32 to vector<32x128xf32>
    %c0_21 = arith.constant 0 : index
    %c0_22 = arith.constant 0 : index
    %c0_23 = arith.constant 0 : index
    %34 = vector.load %arg9[%c0_21, %c0_22, %c0_23] : memref<2x18x64xf32, #tpu.memory_space<vmem>>, vector<2x16x64xf32>
    %35 = vector.shape_cast %34 : vector<2x16x64xf32> to vector<32x64xf32>
    %c0_24 = arith.constant 0 : index
    %c0_25 = arith.constant 0 : index
    %c0_26 = arith.constant 0 : index
    %36 = vector.load %arg4[%c0_24, %c0_25, %c0_26] : memref<3x64x128xf32, #tpu.memory_space<vmem>>, vector<1x64x128xf32>
    %37 = vector.shape_cast %36 : vector<1x64x128xf32> to vector<64x128xf32>
    %cst_27 = arith.constant dense<0.000000e+00> : vector<32x128xf32>
    %38 = tpu.matmul %35, %37, %cst_27 {dimension_numbers = #tpu.dot_dimension_numbers<[1], [0], [0], [1], [0, 0, 1, 1], [], []>} : vector<32x64xf32>, vector<64x128xf32>, vector<32x128xf32> -> vector<32x128xf32>
    %39 = arith.addf %33, %38 : vector<32x128xf32>
    %c0_28 = arith.constant 0 : index
    %c1_29 = arith.constant 1 : index
    %c0_30 = arith.constant 0 : index
    %40 = vector.load %arg9[%c0_28, %c1_29, %c0_30] : memref<2x18x64xf32, #tpu.memory_space<vmem>>, vector<2x16x64xf32>
    %41 = vector.shape_cast %40 : vector<2x16x64xf32> to vector<32x64xf32>
    %c1_31 = arith.constant 1 : index
    %c0_32 = arith.constant 0 : index
    %c0_33 = arith.constant 0 : index
    %42 = vector.load %arg4[%c1_31, %c0_32, %c0_33] : memref<3x64x128xf32, #tpu.memory_space<vmem>>, vector<1x64x128xf32>
    %43 = vector.shape_cast %42 : vector<1x64x128xf32> to vector<64x128xf32>
    %cst_34 = arith.constant dense<0.000000e+00> : vector<32x128xf32>
    %44 = tpu.matmul %41, %43, %cst_34 {dimension_numbers = #tpu.dot_dimension_numbers<[1], [0], [0], [1], [0, 0, 1, 1], [], []>} : vector<32x64xf32>, vector<64x128xf32>, vector<32x128xf32> -> vector<32x128xf32>
    %45 = arith.addf %39, %44 : vector<32x128xf32>
    %c0_35 = arith.constant 0 : index
    %c2 = arith.constant 2 : index
    %c0_36 = arith.constant 0 : index
    %46 = vector.load %arg9[%c0_35, %c2, %c0_36] : memref<2x18x64xf32, #tpu.memory_space<vmem>>, vector<2x16x64xf32>
    %47 = vector.shape_cast %46 : vector<2x16x64xf32> to vector<32x64xf32>
    %c2_37 = arith.constant 2 : index
    %c0_38 = arith.constant 0 : index
    %c0_39 = arith.constant 0 : index
    %48 = vector.load %arg4[%c2_37, %c0_38, %c0_39] : memref<3x64x128xf32, #tpu.memory_space<vmem>>, vector<1x64x128xf32>
    %49 = vector.shape_cast %48 : vector<1x64x128xf32> to vector<64x128xf32>
    %cst_40 = arith.constant dense<0.000000e+00> : vector<32x128xf32>
    %50 = tpu.matmul %47, %49, %cst_40 {dimension_numbers = #tpu.dot_dimension_numbers<[1], [0], [0], [1], [0, 0, 1, 1], [], []>} : vector<32x64xf32>, vector<64x128xf32>, vector<32x128xf32> -> vector<32x128xf32>
    %51 = arith.addf %45, %50 : vector<32x128xf32>
    %c0_41 = arith.constant 0 : index
    %c0_42 = arith.constant 0 : index
    %52 = vector.load %arg5[%c0_41, %c0_42] : memref<1x128xf32, #tpu.memory_space<vmem>>, vector<1x128xf32>
    %53 = vector.broadcast %52 : vector<1x128xf32> to vector<32x128xf32>
    %54 = arith.addf %51, %53 : vector<32x128xf32>
    %55 = arith.negf %54 : vector<32x128xf32>
    %56 = math.exp %55 : vector<32x128xf32>
    %cst_43 = arith.constant 1.000000e+00 : f32
    %57 = vector.broadcast %cst_43 : f32 to vector<32x128xf32>
    %58 = arith.addf %57, %56 : vector<32x128xf32>
    %59 = arith.divf %57, %58 : vector<32x128xf32>
    %60 = arith.mulf %54, %59 : vector<32x128xf32>
    %61 = vector.shape_cast %60 : vector<32x128xf32> to vector<2x16x128xf32>
    %cst_44 = arith.constant 0.000000e+00 : f32
    %62 = vector.broadcast %cst_44 : f32 to vector<2x1x128xf32>
    %c0_45 = arith.constant 0 : index
    %c0_46 = arith.constant 0 : index
    %c0_47 = arith.constant 0 : index
    %63 = vector.load %arg10[%c0_45, %c0_46, %c0_47] : memref<2x18x128xf32, #tpu.memory_space<vmem>>, vector<2x1x128xf32>
    tpu.vector_store %arg10[%c0_45, %c0_46, %c0_47], %62 {strides = array<i32>} : memref<2x18x128xf32, #tpu.memory_space<vmem>>, vector<2x1x128xf32>,
    %c0_48 = arith.constant 0 : index
    %c17_49 = arith.constant 17 : index
    %c0_50 = arith.constant 0 : index
    %64 = vector.load %arg10[%c0_48, %c17_49, %c0_50] : memref<2x18x128xf32, #tpu.memory_space<vmem>>, vector<2x1x128xf32>
    tpu.vector_store %arg10[%c0_48, %c17_49, %c0_50], %62 {strides = array<i32>} : memref<2x18x128xf32, #tpu.memory_space<vmem>>, vector<2x1x128xf32>,
    %c0_51 = arith.constant 0 : index
    %c1_52 = arith.constant 1 : index
    %c0_53 = arith.constant 0 : index
    %65 = vector.load %arg10[%c0_51, %c1_52, %c0_53] : memref<2x18x128xf32, #tpu.memory_space<vmem>>, vector<2x16x128xf32>
    tpu.vector_store %arg10[%c0_51, %c1_52, %c0_53], %61 {strides = array<i32>} : memref<2x18x128xf32, #tpu.memory_space<vmem>>, vector<2x16x128xf32>,
    %cst_54 = arith.constant 0.000000e+00 : f32
    %66 = vector.broadcast %cst_54 : f32 to vector<32x128xf32>
    %c0_55 = arith.constant 0 : index
    %c0_56 = arith.constant 0 : index
    %c0_57 = arith.constant 0 : index
    %67 = vector.load %arg10[%c0_55, %c0_56, %c0_57] : memref<2x18x128xf32, #tpu.memory_space<vmem>>, vector<2x16x128xf32>
    %68 = vector.shape_cast %67 : vector<2x16x128xf32> to vector<32x128xf32>
    %c0_58 = arith.constant 0 : index
    %c0_59 = arith.constant 0 : index
    %c0_60 = arith.constant 0 : index
    %69 = vector.load %arg6[%c0_58, %c0_59, %c0_60] : memref<3x128x128xf32, #tpu.memory_space<vmem>>, vector<1x128x128xf32>
    %70 = vector.shape_cast %69 : vector<1x128x128xf32> to vector<128x128xf32>
    %cst_61 = arith.constant dense<0.000000e+00> : vector<32x128xf32>
    %71 = tpu.matmul %68, %70, %cst_61 {dimension_numbers = #tpu.dot_dimension_numbers<[1], [0], [0], [1], [0, 0, 1, 1], [], []>} : vector<32x128xf32>, vector<128x128xf32>, vector<32x128xf32> -> vector<32x128xf32>
    %72 = arith.addf %66, %71 : vector<32x128xf32>
    %c0_62 = arith.constant 0 : index
    %c1_63 = arith.constant 1 : index
    %c0_64 = arith.constant 0 : index
    %73 = vector.load %arg10[%c0_62, %c1_63, %c0_64] : memref<2x18x128xf32, #tpu.memory_space<vmem>>, vector<2x16x128xf32>
    %74 = vector.shape_cast %73 : vector<2x16x128xf32> to vector<32x128xf32>
    %c1_65 = arith.constant 1 : index
    %c0_66 = arith.constant 0 : index
    %c0_67 = arith.constant 0 : index
    %75 = vector.load %arg6[%c1_65, %c0_66, %c0_67] : memref<3x128x128xf32, #tpu.memory_space<vmem>>, vector<1x128x128xf32>
    %76 = vector.shape_cast %75 : vector<1x128x128xf32> to vector<128x128xf32>
    %cst_68 = arith.constant dense<0.000000e+00> : vector<32x128xf32>
    %77 = tpu.matmul %74, %76, %cst_68 {dimension_numbers = #tpu.dot_dimension_numbers<[1], [0], [0], [1], [0, 0, 1, 1], [], []>} : vector<32x128xf32>, vector<128x128xf32>, vector<32x128xf32> -> vector<32x128xf32>
    %78 = arith.addf %72, %77 : vector<32x128xf32>
    %c0_69 = arith.constant 0 : index
    %c2_70 = arith.constant 2 : index
    %c0_71 = arith.constant 0 : index
    %79 = vector.load %arg10[%c0_69, %c2_70, %c0_71] : memref<2x18x128xf32, #tpu.memory_space<vmem>>, vector<2x16x128xf32>
    %80 = vector.shape_cast %79 : vector<2x16x128xf32> to vector<32x128xf32>
    %c2_72 = arith.constant 2 : index
    %c0_73 = arith.constant 0 : index
    %c0_74 = arith.constant 0 : index
    %81 = vector.load %arg6[%c2_72, %c0_73, %c0_74] : memref<3x128x128xf32, #tpu.memory_space<vmem>>, vector<1x128x128xf32>
    %82 = vector.shape_cast %81 : vector<1x128x128xf32> to vector<128x128xf32>
    %cst_75 = arith.constant dense<0.000000e+00> : vector<32x128xf32>
    %83 = tpu.matmul %80, %82, %cst_75 {dimension_numbers = #tpu.dot_dimension_numbers<[1], [0], [0], [1], [0, 0, 1, 1], [], []>} : vector<32x128xf32>, vector<128x128xf32>, vector<32x128xf32> -> vector<32x128xf32>
    %84 = arith.addf %78, %83 : vector<32x128xf32>
    %c0_76 = arith.constant 0 : index
    %c0_77 = arith.constant 0 : index
    %85 = vector.load %arg7[%c0_76, %c0_77] : memref<1x128xf32, #tpu.memory_space<vmem>>, vector<1x128xf32>
    %86 = vector.broadcast %85 : vector<1x128xf32> to vector<32x128xf32>
    %87 = arith.addf %84, %86 : vector<32x128xf32>
    %88 = arith.negf %87 : vector<32x128xf32>
    %89 = math.exp %88 : vector<32x128xf32>
    %cst_78 = arith.constant 1.000000e+00 : f32
    %90 = vector.broadcast %cst_78 : f32 to vector<32x128xf32>
    %91 = arith.addf %90, %89 : vector<32x128xf32>
    %92 = arith.divf %90, %91 : vector<32x128xf32>
    %93 = arith.mulf %87, %92 : vector<32x128xf32>
    %94 = vector.shape_cast %93 : vector<32x128xf32> to vector<2x16x128xf32>
    %c0_79 = arith.constant 0 : index
    %c0_80 = arith.constant 0 : index
    %c0_81 = arith.constant 0 : index
    %95 = vector.load %arg8[%c0_79, %c0_80, %c0_81] : memref<2x16x128xf32, #tpu.memory_space<vmem>>, vector<2x16x128xf32>
    tpu.vector_store %arg8[%c0_79, %c0_80, %c0_81], %94 {strides = array<i32>} : memref<2x16x128xf32, #tpu.memory_space<vmem>>, vector<2x16x128xf32>,
    return
  }
  func.func @transform_0(%arg0: i32) -> (i32, i32, i32) {
    %c0_i32 = arith.constant 0 : i32
    %c0_i32_0 = arith.constant 0 : i32
    %c0_i32_1 = arith.constant 0 : i32
    return %arg0, %c0_i32, %c0_i32_0 : i32, i32, i32
  }
  func.func @transform_1(%arg0: i32) -> (i32, i32) {
    %c0_i32 = arith.constant 0 : i32
    %c0_i32_0 = arith.constant 0 : i32
    %c0_i32_1 = arith.constant 0 : i32
    return %c0_i32, %c0_i32_0 : i32, i32
  }
  func.func @transform_2(%arg0: i32) -> (i32, i32) {
    %c0_i32 = arith.constant 0 : i32
    %c0_i32_0 = arith.constant 0 : i32
    %c0_i32_1 = arith.constant 0 : i32
    return %c0_i32, %c0_i32_0 : i32, i32
  }
  func.func @transform_3(%arg0: i32) -> (i32, i32, i32) {
    %c0_i32 = arith.constant 0 : i32
    %c0_i32_0 = arith.constant 0 : i32
    %c0_i32_1 = arith.constant 0 : i32
    %c0_i32_2 = arith.constant 0 : i32
    return %c0_i32, %c0_i32_0, %c0_i32_1 : i32, i32, i32
  }
  func.func @transform_4(%arg0: i32) -> (i32, i32) {
    %c0_i32 = arith.constant 0 : i32
    %c0_i32_0 = arith.constant 0 : i32
    %c0_i32_1 = arith.constant 0 : i32
    return %c0_i32, %c0_i32_0 : i32, i32
  }
  func.func @transform_5(%arg0: i32) -> (i32, i32, i32) {
    %c0_i32 = arith.constant 0 : i32
    %c0_i32_0 = arith.constant 0 : i32
    %c0_i32_1 = arith.constant 0 : i32
    %c0_i32_2 = arith.constant 0 : i32
    return %c0_i32, %c0_i32_0, %c0_i32_1 : i32, i32, i32
  }
  func.func @transform_6(%arg0: i32) -> (i32, i32) {
    %c0_i32 = arith.constant 0 : i32
    %c0_i32_0 = arith.constant 0 : i32
    %c0_i32_1 = arith.constant 0 : i32
    return %c0_i32, %c0_i32_0 : i32, i32
  }
  func.func @transform_7(%arg0: i32) -> (i32, i32, i32) {
    %c0_i32 = arith.constant 0 : i32
    %c0_i32_0 = arith.constant 0 : i32
    %c0_i32_1 = arith.constant 0 : i32
    return %arg0, %c0_i32, %c0_i32_0 : i32, i32, i32
  }
}

</mosaic_0001>

<llo_original>
// kernel: tpu_custom_call.1
$region0: #{tpu_custom_call.1}
  #allocation0 [shape = 'u32[]', space=smem, size = 0x4, offset = 0x4, fixed_abs, tag = 'smem constant byte address 0x4 - core index']
  #allocation1 [shape = 'u32[144,128]{1,0:T(1,128)}', space=vmem, size = 0x12000, scoped, tag = 'internal scratch']
  #allocation2 [shape = 'f32[2,18,64]{2,1,0:T(8,128)}', space=vmem, size = 0x6000, scoped, tag = 'scratch operand']
  #allocation3 [shape = 'f32[2,18,128]{2,1,0:T(8,128)}', space=vmem, size = 0x6000, scoped, tag = 'scratch operand']
  %s0 = inlined_call_operand.hbm [shape: f32[2,16,64], index: 0, kind: input, shape index: {}]
  %s1 = inlined_call_operand.hbm [shape: f32[16,64], index: 1, kind: input, shape index: {}]
  %s2 = inlined_call_operand.hbm [shape: f32[16,64], index: 2, kind: input, shape index: {}]
  %s3 = inlined_call_operand.hbm [shape: f32[3,64,128], index: 3, kind: input, shape index: {}]
  %s4 = inlined_call_operand.vmem [shape: f32[1,128], index: 4, kind: input, shape index: {}]
  %s5 = inlined_call_operand.hbm [shape: f32[3,128,128], index: 5, kind: input, shape index: {}]
  %s6 = inlined_call_operand.vmem [shape: f32[1,128], index: 6, kind: input, shape index: {}]
  %s7 = inlined_call_operand.hbm [shape: f32[2,16,128], index: 7, kind: output, shape index: {}]
  %s8 = sld [smem:[#allocation0]]
  $region58: #{tpu_custom_call.1} parent=0
    _
  %s10 = ssub.s32 1, %s8
  %s11 = scalar_select 0, %s10, %s8
  $region1: #{tpu_custom_call.1} parent=0
    #allocation4 [shape = 'u8[16384]{0}', space=vmem, size = 0x4000, scoped, tag = 'input window, operand 0, single buffered']
    #allocation5 [shape = 's32[1]{0}', space=sflag, size = 0x4, scoped, tag = 'scoped memory for tpu_custom_call.1']
    #allocation6 [shape = 's32[1]{0}', space=sflag, size = 0x4, scoped, tag = 'scoped memory for tpu_custom_call.1']
    #allocation7 [shape = 'u8[8192]{0}', space=vmem, size = 0x2000, scoped, tag = 'input window, operand 1, single buffered']
    #allocation8 [shape = 's32[1]{0}', space=sflag, size = 0x4, scoped, tag = 'scoped memory for tpu_custom_call.1']
    #allocation9 [shape = 'u8[8192]{0}', space=vmem, size = 0x2000, scoped, tag = 'input window, operand 2, single buffered']
    #allocation10 [shape = 'u8[98304]{0}', space=vmem, size = 0x18000, scoped, tag = 'input window, operand 3, single buffered']
    #allocation11 [shape = 's32[1]{0}', space=sflag, size = 0x4, scoped, tag = 'scoped memory for tpu_custom_call.1']
    #allocation12 [shape = 'u8[196608]{0}', space=vmem, size = 0x30000, scoped, tag = 'input window, operand 5, single buffered']
    #allocation13 [shape = 'u8[16384]{0}', space=vmem, size = 0x4000, scoped, tag = 'output window, operand 0, single buffered']
    %12 = vsyncpa [#allocation5], 0
    %13 = vsyncpa [#allocation8], 0
    %14 = vsyncpa [#allocation11], 0
    %15 = vsyncpa [#allocation6], 0
    // Predicated region
    $region2: #{tpu_custom_call.1} parent=1 // pred_check
      _
    $region3: #{tpu_custom_call.1} parent=1 // pred_check_branch
      %17 = sbr.rel (0) target = $region5
    $region4: #{tpu_custom_call.1} parent=1 // pred_region
      %s19 = ssub.s32 512, 512
      %20 = vsyncadd [#allocation5], %s19
      %s21 = sshll.u32 [#allocation4], 4
      %s22 = int_to_ptr.vmem [resolvable:$true] %s21
      %27 = dma.hbm_to_vmem [thread:$0]  %s0, 512, %s22, [#allocation5], 128, 128, 8
    $region5: #{tpu_custom_call.1} parent=1 // pred_fallthru
      _
    // Predicated region
    $region6: #{tpu_custom_call.1} parent=1 // pred_check
      _
    $region7: #{tpu_custom_call.1} parent=1 // pred_check_branch
      %29 = sbr.rel (0) target = $region9
    $region8: #{tpu_custom_call.1} parent=1 // pred_region
      %s31 = ssub.s32 256, 256
      %32 = vsyncadd [#allocation8], %s31
      %s33 = sshll.u32 [#allocation7], 4
      %s34 = int_to_ptr.vmem [resolvable:$true] %s33
      %39 = dma.hbm_to_vmem [thread:$0]  %s1, 256, %s34, [#allocation8], 128, 128, 8
    $region9: #{tpu_custom_call.1} parent=1 // pred_fallthru
      _
    // Predicated region
    $region10: #{tpu_custom_call.1} parent=1 // pred_check
      _
    $region11: #{tpu_custom_call.1} parent=1 // pred_check_branch
      %41 = sbr.rel (0) target = $region13
    $region12: #{tpu_custom_call.1} parent=1 // pred_region
      %s43 = ssub.s32 256, 256
      %44 = vsyncadd [#allocation8], %s43
      %s45 = sshll.u32 [#allocation9], 4
      %s46 = int_to_ptr.vmem [resolvable:$true] %s45
      %51 = dma.hbm_to_vmem [thread:$0]  %s2, 256, %s46, [#allocation8], 128, 128, 8
    $region13: #{tpu_custom_call.1} parent=1 // pred_fallthru
      _
    // Predicated region
    $region14: #{tpu_custom_call.1} parent=1 // pred_check
      _
    $region15: #{tpu_custom_call.1} parent=1 // pred_check_branch
      %53 = sbr.rel (0) target = $region17
    $region16: #{tpu_custom_call.1} parent=1 // pred_region
      %s55 = ssub.s32 3072, 3072
      %56 = vsyncadd [#allocation11], %s55
      %s57 = sshll.u32 [#allocation10], 4
      %s58 = int_to_ptr.vmem [resolvable:$true] %s57
      %63 = dma.hbm_to_vmem [thread:$0]  %s3, 3072, %s58, [#allocation11], 128, 128, 8
    $region17: #{tpu_custom_call.1} parent=1 // pred_fallthru
      _
    // Predicated region
    $region18: #{tpu_custom_call.1} parent=1 // pred_check
      _
    $region19: #{tpu_custom_call.1} parent=1 // pred_check_branch
      %65 = sbr.rel (0) target = $region21
    $region20: #{tpu_custom_call.1} parent=1 // pred_region
      _
    $region21: #{tpu_custom_call.1} parent=1 // pred_fallthru
      _
    // Predicated region
    $region22: #{tpu_custom_call.1} parent=1 // pred_check
      _
    $region23: #{tpu_custom_call.1} parent=1 // pred_check_branch
      %67 = sbr.rel (0) target = $region25
    $region24: #{tpu_custom_call.1} parent=1 // pred_region
      %s69 = ssub.s32 6144, 6144
      %70 = vsyncadd [#allocation11], %s69
      %s71 = sshll.u32 [#allocation12], 4
      %s72 = int_to_ptr.vmem [resolvable:$true] %s71
      %77 = dma.hbm_to_vmem [thread:$0]  %s5, 6144, %s72, [#allocation11], 128, 128, 8
    $region25: #{tpu_custom_call.1} parent=1 // pred_fallthru
      _
    // Predicated region
    $region26: #{tpu_custom_call.1} parent=1 // pred_check
      _
    $region27: #{tpu_custom_call.1} parent=1 // pred_check_branch
      %79 = sbr.rel (0) target = $region29
    $region28: #{tpu_custom_call.1} parent=1 // pred_region
      _
    $region29: #{tpu_custom_call.1} parent=1 // pred_fallthru
      _
    // Predicated region
    $region30: #{tpu_custom_call.1} parent=1 // pred_check
      _
    $region31: #{tpu_custom_call.1} parent=1 // pred_check_branch
      %81 = sbr.rel (0) target = $region33
    $region32: #{tpu_custom_call.1} parent=1 // pred_region
      %82 = dma.done [#allocation5], 512
    $region33: #{tpu_custom_call.1} parent=1 // pred_fallthru
      _
    // Predicated region
    $region34: #{tpu_custom_call.1} parent=1 // pred_check
      _
    $region35: #{tpu_custom_call.1} parent=1 // pred_check_branch
      %84 = sbr.rel (0) target = $region37
    $region36: #{tpu_custom_call.1} parent=1 // pred_region
      %85 = dma.done [#allocation8], 256
    $region37: #{tpu_custom_call.1} parent=1 // pred_fallthru
      _
    // Predicated region
    $region38: #{tpu_custom_call.1} parent=1 // pred_check
      _
    $region39: #{tpu_custom_call.1} parent=1 // pred_check_branch
      %87 = sbr.rel (0) target = $region41
    $region40: #{tpu_custom_call.1} parent=1 // pred_region
      %88 = dma.done [#allocation8], 256
    $region41: #{tpu_custom_call.1} parent=1 // pred_fallthru
      _
    // Predicated region
    $region42: #{tpu_custom_call.1} parent=1 // pred_check
      _
    $region43: #{tpu_custom_call.1} parent=1 // pred_check_branch
      %90 = sbr.rel (0) target = $region45
    $region44: #{tpu_custom_call.1} parent=1 // pred_region
      %91 = dma.done [#allocation11], 3072
    $region45: #{tpu_custom_call.1} parent=1 // pred_fallthru
      _
    // Predicated region
    $region46: #{tpu_custom_call.1} parent=1 // pred_check
      _
    $region47: #{tpu_custom_call.1} parent=1 // pred_check_branch
      %93 = sbr.rel (0) target = $region49
    $region48: #{tpu_custom_call.1} parent=1 // pred_region
      %94 = dma.done [#allocation11], 6144
    $region49: #{tpu_custom_call.1} parent=1 // pred_fallthru
      _
    %v95 = vld [vmem:[#allocation4] sm:$0xff]
    %v96 = vld [vmem:[#allocation4 + $0x8] sm:$0xff]
    %v97 = vld [vmem:[#allocation4 + $0x10] sm:$0xff]
    %v98 = vld [vmem:[#allocation4 + $0x18] sm:$0xff]
    %vm99 = vcmask 523264
    %v100 = vsel %vm99, %v95, 0.0
    %101 = vadd.xlane.f32.xlu0 %v100
    %v102 = vpop.xlane.xlu0 %101
    %v103 = vsel %vm99, %v96, 0.0
    %104 = vadd.xlane.f32.xlu0 %v103
    %v105 = vpop.xlane.xlu0 %104
    %v106 = vsel %vm99, %v97, 0.0
    %107 = vadd.xlane.f32.xlu0 %v106
    %v108 = vpop.xlane.xlu0 %107
    %v109 = vsel %vm99, %v98, 0.0
    %110 = vadd.xlane.f32.xlu0 %v109
    %v111 = vpop.xlane.xlu0 %110
    %v112 = vadd.f32 %v102, %v105
    %v113 = vrot.slane %v112, 4
    %v114 = vadd.f32 %v112, %v113
    %v115 = vrot.slane %v114, 2
    %v116 = vadd.f32 %v114, %v115
    %v117 = vrot.slane %v116, 1
    %v118 = vadd.f32 %v116, %v117
    %v119 = vadd.f32 %v108, %v111
    %v120 = vrot.slane %v119, 4
    %v121 = vadd.f32 %v119, %v120
    %v122 = vrot.slane %v121, 2
    %v123 = vadd.f32 %v121, %v122
    %v124 = vrot.slane %v123, 1
    %v125 = vadd.f32 %v123, %v124
    %v126 = vrcp.pop 1024.0
    %v127 = vmul.f32 %v118, %v126
    %v128 = vmul.f32 %v125, %v126
    %v129 = vsub.f32 %v95, %v127
    %v130 = vsub.f32 %v96, %v127
    %v131 = vsub.f32 %v97, %v128
    %v132 = vsub.f32 %v98, %v128
    %v133 = vmul.f32 %v129, %v129
    %v134 = vmul.f32 %v130, %v130
    %v135 = vmul.f32 %v131, %v131
    %v136 = vmul.f32 %v132, %v132
    %v137 = vsel %vm99, %v133, 0.0
    %138 = vadd.xlane.f32.xlu0 %v137
    %v139 = vpop.xlane.xlu0 %138
    %v140 = vsel %vm99, %v134, 0.0
    %141 = vadd.xlane.f32.xlu0 %v140
    %v142 = vpop.xlane.xlu0 %141
    %v143 = vsel %vm99, %v135, 0.0
    %144 = vadd.xlane.f32.xlu0 %v143
    %v145 = vpop.xlane.xlu0 %144
    %v146 = vsel %vm99, %v136, 0.0
    %147 = vadd.xlane.f32.xlu0 %v146
    %v148 = vpop.xlane.xlu0 %147
    %v149 = vadd.f32 %v139, %v142
    %v150 = vrot.slane %v149, 4
    %v151 = vadd.f32 %v149, %v150
    %v152 = vrot.slane %v151, 2
    %v153 = vadd.f32 %v151, %v152
    %v154 = vrot.slane %v153, 1
    %v155 = vadd.f32 %v153, %v154
    %v156 = vadd.f32 %v145, %v148
    %v157 = vrot.slane %v156, 4
    %v158 = vadd.f32 %v156, %v157
    %v159 = vrot.slane %v158, 2
    %v160 = vadd.f32 %v158, %v159
    %v161 = vrot.slane %v160, 1
    %v162 = vadd.f32 %v160, %v161
    %v163 = vmul.f32 %v155, %v126
    %v164 = vmul.f32 %v162, %v126
    %v165 = vadd.f32 %v163, 1e-05
    %v166 = vadd.f32 %v164, 1e-05
    %v167 = vrsqrt.pop %v165
    %v168 = vrsqrt.pop %v166
    %v169 = vmul.f32 %v129, %v167
    %v170 = vmul.f32 %v130, %v167
    %v171 = vmul.f32 %v131, %v168
    %v172 = vmul.f32 %v132, %v168
    %v173 = vld [vmem:[#allocation7] sm:$0xff]
    %v174 = vld [vmem:[#allocation7 + $0x8] sm:$0xff]
    %v175 = vmul.f32 %v169, %v173
    %v176 = vmul.f32 %v170, %v174
    %v177 = vmul.f32 %v171, %v173
    %v178 = vmul.f32 %v172, %v174
    %v179 = vld [vmem:[#allocation9] sm:$0xff]
    %v180 = vld [vmem:[#allocation9 + $0x8] sm:$0xff]
    %v181 = vadd.f32 %v175, %v179
    %v182 = vadd.f32 %v176, %v180
    %v183 = vadd.f32 %v177, %v179
    %v184 = vadd.f32 %v178, %v180
    %vm185 = vcmask 516096
    %186 = vst.msk [vmem:[#allocation2] sm:$0x1] %vm185, 0.0
    %187 = vst.msk [vmem:[#allocation2 + $0x18] sm:$0x1] %vm185, 0.0
    %188 = vst.msk [vmem:[#allocation2 + $0x11] sm:$0x1] %vm185, 0.0
    %189 = vst.msk [vmem:[#allocation2 + $0x29] sm:$0x1] %vm185, 0.0
    %190 = vst.msk [vmem:[#allocation2 + $0x1] sm:$0xff] %vm99, %v181
    %191 = vst.msk [vmem:[#allocation2 + $0x9] sm:$0xff] %vm99, %v182
    %192 = vst.msk [vmem:[#allocation2 + $0x19] sm:$0xff] %vm99, %v183
    %193 = vst.msk [vmem:[#allocation2 + $0x21] sm:$0xff] %vm99, %v184
    %v194 = vld [vmem:[#allocation2] sm:$0xff]
    %v195 = vld [vmem:[#allocation2 + $0x8] sm:$0xff]
    %v196 = vld [vmem:[#allocation2 + $0x18] sm:$0xff]
    %v197 = vld [vmem:[#allocation2 + $0x20] sm:$0xff]
    %v198 = vld [vmem:[#allocation10] sm:$0xff]
    %v199 = vld [vmem:[#allocation10 + $0x8] sm:$0xff]
    %v200 = vld [vmem:[#allocation10 + $0x10] sm:$0xff]
    %v201 = vld [vmem:[#allocation10 + $0x18] sm:$0xff]
    %v202 = vld [vmem:[#allocation10 + $0x20] sm:$0xff]
    %v203 = vld [vmem:[#allocation10 + $0x28] sm:$0xff]
    %v204 = vld [vmem:[#allocation10 + $0x30] sm:$0xff]
    %v205 = vld [vmem:[#allocation10 + $0x38] sm:$0xff]
    %v206 = vld [vmem:[#allocation2 + $0x1] sm:$0xff]
    %v207 = vld [vmem:[#allocation2 + $0x9] sm:$0xff]
    %v208 = vld [vmem:[#allocation2 + $0x19] sm:$0xff]
    %v209 = vld [vmem:[#allocation2 + $0x21] sm:$0xff]
    %s210 = scalar_lea.vmem [#allocation10], 64
    %v211 = vld [vmem:[%s210] sm:$0xff]
    %v212 = vld [vmem:[%s210 + $0x8] sm:$0xff]
    %v213 = vld [vmem:[%s210 + $0x10] sm:$0xff]
    %v214 = vld [vmem:[%s210 + $0x18] sm:$0xff]
    %v215 = vld [vmem:[%s210 + $0x20] sm:$0xff]
    %v216 = vld [vmem:[%s210 + $0x28] sm:$0xff]
    %v217 = vld [vmem:[%s210 + $0x30] sm:$0xff]
    %v218 = vld [vmem:[%s210 + $0x38] sm:$0xff]
    %v220 = vsel %vm99, %v206, 0
    %v223 = vsel %vm99, %v207, 0
    %v226 = vsel %vm99, %v208, 0
    %v229 = vsel %vm99, %v209, 0
    %231 = vmatprep.subr.mxu0 0.0
    %232 = vmatpush1.msra.mxu0 0.0
    %233 = vmatprep.subr.mxu0 0.0
    %234 = vmatpush1.msra.mxu0 0.0
    %235 = vmatprep.subr.mxu0 0.0
    %236 = vmatpush1.msra.mxu0 0.0
    %237 = vmatprep.subr.mxu0 0.0
    %238 = vmatpush1.msra.mxu0 0.0
    %239 = vmatprep.subr.mxu0 0.0
    %240 = vmatpush1.msra.mxu0 0.0
    %241 = vmatprep.subr.mxu0 0.0
    %242 = vmatpush1.msra.mxu0 0.0
    %243 = vmatprep.subr.mxu0 0.0
    %244 = vmatpush1.msra.mxu0 0.0
    %245 = vmatprep.subr.mxu0 0.0
    %246 = vmatpush1.msra.mxu0 0.0
    %247 = vmatprep.subr.mxu0 0.0
    %248 = vmatpush1.msra.mxu0 %v218
    %249 = vmatprep.subr.mxu0 0.0
    %250 = vmatpush1.msra.mxu0 %v217
    %251 = vmatprep.subr.mxu0 0.0
    %252 = vmatpush1.msra.mxu0 %v216
    %253 = vmatprep.subr.mxu0 0.0
    %254 = vmatpush1.msra.mxu0 %v215
    %255 = vmatprep.subr.mxu0 0.0
    %256 = vmatpush1.msra.mxu0 %v214
    %257 = vmatprep.subr.mxu0 0.0
    %258 = vmatpush1.msra.mxu0 %v213
    %259 = vmatprep.subr.mxu0 0.0
    %260 = vmatpush1.msra.mxu0 %v212
    %261 = vmatprep.subr.mxu0 0.0
    %262 = vmatpush1.msra.mxu0 %v211
    %263 = vmatprep.subr.mxu0 0.0
    %264 = vmatpush2.msra.mxu0 0.0
    %265 = vmatprep.subr.mxu0 0.0
    %266 = vmatpush2.msra.mxu0 0.0
    %267 = vmatprep.subr.mxu0 0.0
    %268 = vmatpush2.msra.mxu0 0.0
    %269 = vmatprep.subr.mxu0 0.0
    %270 = vmatpush2.msra.mxu0 0.0
    %271 = vmatprep.subr.mxu0 0.0
    %272 = vmatpush2.msra.mxu0 0.0
    %273 = vmatprep.subr.mxu0 0.0
    %274 = vmatpush2.msra.mxu0 0.0
    %275 = vmatprep.subr.mxu0 0.0
    %276 = vmatpush2.msra.mxu0 0.0
    %277 = vmatprep.subr.mxu0 0.0
    %278 = vmatpush2.msra.mxu0 0.0
    %279 = vmatprep.subr.mxu0 0.0
    %280 = vmatpush2.msra.mxu0 0.0
    %281 = vmatprep.subr.mxu0 0.0
    %282 = vmatpush2.msra.mxu0 0.0
    %283 = vmatprep.subr.mxu0 0.0
    %284 = vmatpush2.msra.mxu0 0.0
    %285 = vmatprep.subr.mxu0 0.0
    %286 = vmatpush2.msra.mxu0 0.0
    %287 = vmatprep.subr.mxu0 0.0
    %288 = vmatpush2.msra.mxu0 0.0
    %289 = vmatprep.subr.mxu0 0.0
    %290 = vmatpush2.msra.mxu0 0.0
    %291 = vmatprep.subr.mxu0 0.0
    %292 = vmatpush2.msra.mxu0 0.0
    %293 = vmatprep.subr.mxu0 0.0
    %294 = vmatpush2.msra.mxu0 0.0
    %295 = vmatprep.mubr.f32.mxu0 0.0
    %296 = vmatmul.mubr.f32.gmra.mxu0 %v220
    %v297 = vpop.f32.mrf.mxu0
    %v298 = vadd.f32 0.0, %v297
    %v299 = vpop.f32.mrf.mxu0
    %300 = vmatprep.mubr.f32.mxu0 0.0
    %301 = vmatmul.mubr.f32.gmra.mxu0 %v223
    %v302 = vpop.f32.mrf.mxu0
    %v303 = vadd.f32 0.0, %v302
    %v304 = vpop.f32.mrf.mxu0
    %305 = vmatprep.mubr.f32.mxu0 0.0
    %306 = vmatmul.mubr.f32.gmra.mxu0 %v226
    %v307 = vpop.f32.mrf.mxu0
    %v308 = vadd.f32 0.0, %v307
    %v309 = vpop.f32.mrf.mxu0
    %310 = vmatprep.mubr.f32.mxu0 0.0
    %311 = vmatmul.mubr.f32.gmra.mxu0 %v229
    %v312 = vpop.f32.mrf.mxu0
    %v313 = vadd.f32 0.0, %v312
    %v314 = vpop.f32.mrf.mxu0
    %315 = vdwg.mxu0
    %v317 = vsel %vm99, %v194, 0
    %v320 = vsel %vm99, %v195, 0
    %v323 = vsel %vm99, %v196, 0
    %v326 = vsel %vm99, %v197, 0
    %328 = vmatprep.subr.mxu0 0.0
    %329 = vmatpush1.msra.mxu0 0.0
    %330 = vmatprep.subr.mxu0 0.0
    %331 = vmatpush1.msra.mxu0 0.0
    %332 = vmatprep.subr.mxu0 0.0
    %333 = vmatpush1.msra.mxu0 0.0
    %334 = vmatprep.subr.mxu0 0.0
    %335 = vmatpush1.msra.mxu0 0.0
    %336 = vmatprep.subr.mxu0 0.0
    %337 = vmatpush1.msra.mxu0 0.0
    %338 = vmatprep.subr.mxu0 0.0
    %339 = vmatpush1.msra.mxu0 0.0
    %340 = vmatprep.subr.mxu0 0.0
    %341 = vmatpush1.msra.mxu0 0.0
    %342 = vmatprep.subr.mxu0 0.0
    %343 = vmatpush1.msra.mxu0 0.0
    %344 = vmatprep.subr.mxu0 0.0
    %345 = vmatpush1.msra.mxu0 %v205
    %346 = vmatprep.subr.mxu0 0.0
    %347 = vmatpush1.msra.mxu0 %v204
    %348 = vmatprep.subr.mxu0 0.0
    %349 = vmatpush1.msra.mxu0 %v203
    %350 = vmatprep.subr.mxu0 0.0
    %351 = vmatpush1.msra.mxu0 %v202
    %352 = vmatprep.subr.mxu0 0.0
    %353 = vmatpush1.msra.mxu0 %v201
    %354 = vmatprep.subr.mxu0 0.0
    %355 = vmatpush1.msra.mxu0 %v200
    %356 = vmatprep.subr.mxu0 0.0
    %357 = vmatpush1.msra.mxu0 %v199
    %358 = vmatprep.subr.mxu0 0.0
    %359 = vmatpush1.msra.mxu0 %v198
    %360 = vmatprep.subr.mxu0 0.0
    %361 = vmatpush2.msra.mxu0 0.0
    %362 = vmatprep.subr.mxu0 0.0
    %363 = vmatpush2.msra.mxu0 0.0
    %364 = vmatprep.subr.mxu0 0.0
    %365 = vmatpush2.msra.mxu0 0.0
    %366 = vmatprep.subr.mxu0 0.0
    %367 = vmatpush2.msra.mxu0 0.0
    %368 = vmatprep.subr.mxu0 0.0
    %369 = vmatpush2.msra.mxu0 0.0
    %370 = vmatprep.subr.mxu0 0.0
    %371 = vmatpush2.msra.mxu0 0.0
    %372 = vmatprep.subr.mxu0 0.0
    %373 = vmatpush2.msra.mxu0 0.0
    %374 = vmatprep.subr.mxu0 0.0
    %375 = vmatpush2.msra.mxu0 0.0
    %376 = vmatprep.subr.mxu0 0.0
    %377 = vmatpush2.msra.mxu0 0.0
    %378 = vmatprep.subr.mxu0 0.0
    %379 = vmatpush2.msra.mxu0 0.0
    %380 = vmatprep.subr.mxu0 0.0
    %381 = vmatpush2.msra.mxu0 0.0
    %382 = vmatprep.subr.mxu0 0.0
    %383 = vmatpush2.msra.mxu0 0.0
    %384 = vmatprep.subr.mxu0 0.0
    %385 = vmatpush2.msra.mxu0 0.0
    %386 = vmatprep.subr.mxu0 0.0
    %387 = vmatpush2.msra.mxu0 0.0
    %388 = vmatprep.subr.mxu0 0.0
    %389 = vmatpush2.msra.mxu0 0.0
    %390 = vmatprep.subr.mxu0 0.0
    %391 = vmatpush2.msra.mxu0 0.0
    %392 = vmatprep.mubr.f32.mxu0 0.0
    %393 = vmatmul.mubr.f32.gmra.mxu0 %v317
    %v394 = vpop.f32.mrf.mxu0
    %v395 = vadd.f32 %v298, %v394
    %v396 = vpop.f32.mrf.mxu0
    %397 = vmatprep.mubr.f32.mxu0 0.0
    %398 = vmatmul.mubr.f32.gmra.mxu0 %v320
    %v399 = vpop.f32.mrf.mxu0
    %v400 = vadd.f32 %v303, %v399
    %v401 = vpop.f32.mrf.mxu0
    %402 = vmatprep.mubr.f32.mxu0 0.0
    %403 = vmatmul.mubr.f32.gmra.mxu0 %v323
    %v404 = vpop.f32.mrf.mxu0
    %v405 = vadd.f32 %v308, %v404
    %v406 = vpop.f32.mrf.mxu0
    %407 = vmatprep.mubr.f32.mxu0 0.0
    %408 = vmatmul.mubr.f32.gmra.mxu0 %v326
    %v409 = vpop.f32.mrf.mxu0
    %v410 = vadd.f32 %v313, %v409
    %v411 = vpop.f32.mrf.mxu0
    %412 = vdwg.mxu0
    %v413 = vld [vmem:[#allocation2 + $0x2] sm:$0xff]
    %v414 = vld [vmem:[#allocation2 + $0xa] sm:$0xff]
    %v415 = vld [vmem:[#allocation2 + $0x1a] sm:$0xff]
    %v416 = vld [vmem:[#allocation2 + $0x22] sm:$0xff]
    %s417 = scalar_lea.vmem [#allocation10], 128
    %v418 = vld [vmem:[%s417] sm:$0xff]
    %v419 = vld [vmem:[%s417 + $0x8] sm:$0xff]
    %v420 = vld [vmem:[%s417 + $0x10] sm:$0xff]
    %v421 = vld [vmem:[%s417 + $0x18] sm:$0xff]
    %v422 = vld [vmem:[%s417 + $0x20] sm:$0xff]
    %v423 = vld [vmem:[%s417 + $0x28] sm:$0xff]
    %v424 = vld [vmem:[%s417 + $0x30] sm:$0xff]
    %v425 = vld [vmem:[%s417 + $0x38] sm:$0xff]
    %v427 = vsel %vm99, %v413, 0
    %v430 = vsel %vm99, %v414, 0
    %v433 = vsel %vm99, %v415, 0
    %v436 = vsel %vm99, %v416, 0
    %438 = vmatprep.subr.mxu0 0.0
    %439 = vmatpush1.msra.mxu0 0.0
    %440 = vmatprep.subr.mxu0 0.0
    %441 = vmatpush1.msra.mxu0 0.0
    %442 = vmatprep.subr.mxu0 0.0
    %443 = vmatpush1.msra.mxu0 0.0
    %444 = vmatprep.subr.mxu0 0.0
    %445 = vmatpush1.msra.mxu0 0.0
    %446 = vmatprep.subr.mxu0 0.0
    %447 = vmatpush1.msra.mxu0 0.0
    %448 = vmatprep.subr.mxu0 0.0
    %449 = vmatpush1.msra.mxu0 0.0
    %450 = vmatprep.subr.mxu0 0.0
    %451 = vmatpush1.msra.mxu0 0.0
    %452 = vmatprep.subr.mxu0 0.0
    %453 = vmatpush1.msra.mxu0 0.0
    %454 = vmatprep.subr.mxu0 0.0
    %455 = vmatpush1.msra.mxu0 %v425
    %456 = vmatprep.subr.mxu0 0.0
    %457 = vmatpush1.msra.mxu0 %v424
    %458 = vmatprep.subr.mxu0 0.0
    %459 = vmatpush1.msra.mxu0 %v423
    %460 = vmatprep.subr.mxu0 0.0
    %461 = vmatpush1.msra.mxu0 %v422
    %462 = vmatprep.subr.mxu0 0.0
    %463 = vmatpush1.msra.mxu0 %v421
    %464 = vmatprep.subr.mxu0 0.0
    %465 = vmatpush1.msra.mxu0 %v420
    %466 = vmatprep.subr.mxu0 0.0
    %467 = vmatpush1.msra.mxu0 %v419
    %468 = vmatprep.subr.mxu0 0.0
    %469 = vmatpush1.msra.mxu0 %v418
    %470 = vmatprep.subr.mxu0 0.0
    %471 = vmatpush2.msra.mxu0 0.0
    %472 = vmatprep.subr.mxu0 0.0
    %473 = vmatpush2.msra.mxu0 0.0
    %474 = vmatprep.subr.mxu0 0.0
    %475 = vmatpush2.msra.mxu0 0.0
    %476 = vmatprep.subr.mxu0 0.0
    %477 = vmatpush2.msra.mxu0 0.0
    %478 = vmatprep.subr.mxu0 0.0
    %479 = vmatpush2.msra.mxu0 0.0
    %480 = vmatprep.subr.mxu0 0.0
    %481 = vmatpush2.msra.mxu0 0.0
    %482 = vmatprep.subr.mxu0 0.0
    %483 = vmatpush2.msra.mxu0 0.0
    %484 = vmatprep.subr.mxu0 0.0
    %485 = vmatpush2.msra.mxu0 0.0
    %486 = vmatprep.subr.mxu0 0.0
    %487 = vmatpush2.msra.mxu0 0.0
    %488 = vmatprep.subr.mxu0 0.0
    %489 = vmatpush2.msra.mxu0 0.0
    %490 = vmatprep.subr.mxu0 0.0
    %491 = vmatpush2.msra.mxu0 0.0
    %492 = vmatprep.subr.mxu0 0.0
    %493 = vmatpush2.msra.mxu0 0.0
    %494 = vmatprep.subr.mxu0 0.0
    %495 = vmatpush2.msra.mxu0 0.0
    %496 = vmatprep.subr.mxu0 0.0
    %497 = vmatpush2.msra.mxu0 0.0
    %498 = vmatprep.subr.mxu0 0.0
    %499 = vmatpush2.msra.mxu0 0.0
    %500 = vmatprep.subr.mxu0 0.0
    %501 = vmatpush2.msra.mxu0 0.0
    %502 = vmatprep.mubr.f32.mxu0 0.0
    %503 = vmatmul.mubr.f32.gmra.mxu0 %v427
    %v504 = vpop.f32.mrf.mxu0
    %v505 = vadd.f32 0.0, %v504
    %v506 = vpop.f32.mrf.mxu0
    %507 = vmatprep.mubr.f32.mxu0 0.0
    %508 = vmatmul.mubr.f32.gmra.mxu0 %v430
    %v509 = vpop.f32.mrf.mxu0
    %v510 = vadd.f32 0.0, %v509
    %v511 = vpop.f32.mrf.mxu0
    %512 = vmatprep.mubr.f32.mxu0 0.0
    %513 = vmatmul.mubr.f32.gmra.mxu0 %v433
    %v514 = vpop.f32.mrf.mxu0
    %v515 = vadd.f32 0.0, %v514
    %v516 = vpop.f32.mrf.mxu0
    %517 = vmatprep.mubr.f32.mxu0 0.0
    %518 = vmatmul.mubr.f32.gmra.mxu0 %v436
    %v519 = vpop.f32.mrf.mxu0
    %v520 = vadd.f32 0.0, %v519
    %v521 = vpop.f32.mrf.mxu0
    %522 = vdwg.mxu0
    %v523 = vadd.f32 %v395, %v505
    %v524 = vadd.f32 %v400, %v510
    %v525 = vadd.f32 %v405, %v515
    %v526 = vadd.f32 %v410, %v520
    %v527 = vld [vmem:[%s4] sm:$0x1]
    %v529 = vlaneseq
    %v530 = vshrl.u32 %v529, 7
    %v531 = vsub.s32 0, %v530
    %v532 = vrot.slane %v527, %v531
    %v534 = vadd.f32 %v523, %v532
    %v535 = vadd.f32 %v524, %v532
    %v536 = vadd.f32 %v525, %v532
    %v537 = vadd.f32 %v526, %v532
    %v538 = vxor.u32 %v534, 2147483648
    %v539 = vxor.u32 %v535, 2147483648
    %v540 = vxor.u32 %v536, 2147483648
    %v541 = vxor.u32 %v537, 2147483648
    %v542 = vmul.f32 %v538, 1.442695
    %v543 = vpow.pop %v542
    %v544 = vmul.f32 %v539, 1.442695
    %v545 = vpow.pop %v544
    %v546 = vmul.f32 %v540, 1.442695
    %v547 = vpow.pop %v546
    %v548 = vmul.f32 %v541, 1.442695
    %v549 = vpow.pop %v548
    %v550 = vadd.f32 %v543, 1.0
    %v551 = vadd.f32 %v545, 1.0
    %v552 = vadd.f32 %v547, 1.0
    %v553 = vadd.f32 %v549, 1.0
    %v554 = vrcp.pop %v550
    %v555 = vmul.f32 1.0, %v554
    %v556 = vrcp.pop %v551
    %v557 = vmul.f32 1.0, %v556
    %v558 = vrcp.pop %v552
    %v559 = vmul.f32 1.0, %v558
    %v560 = vrcp.pop %v553
    %v561 = vmul.f32 1.0, %v560
    %v562 = vmul.f32 %v534, %v555
    %v563 = vmul.f32 %v535, %v557
    %v564 = vmul.f32 %v536, %v559
    %v565 = vmul.f32 %v537, %v561
    %566 = vst [vmem:[#allocation3] sm:$0x1] 0.0
    %567 = vst [vmem:[#allocation3 + $0x18] sm:$0x1] 0.0
    %568 = vst [vmem:[#allocation3 + $0x11] sm:$0x1] 0.0
    %569 = vst [vmem:[#allocation3 + $0x29] sm:$0x1] 0.0
    %570 = vst [vmem:[#allocation3 + $0x1] sm:$0xff] %v562
    %571 = vst [vmem:[#allocation3 + $0x9] sm:$0xff] %v563
    %572 = vst [vmem:[#allocation3 + $0x19] sm:$0xff] %v564
    %573 = vst [vmem:[#allocation3 + $0x21] sm:$0xff] %v565
    %v574 = vld [vmem:[#allocation3] sm:$0xff]
    %v575 = vld [vmem:[#allocation3 + $0x8] sm:$0xff]
    %v576 = vld [vmem:[#allocation3 + $0x18] sm:$0xff]
    %v577 = vld [vmem:[#allocation3 + $0x20] sm:$0xff]
    %v578 = vld [vmem:[#allocation12] sm:$0xff]
    %v579 = vld [vmem:[#allocation12 + $0x8] sm:$0xff]
    %v580 = vld [vmem:[#allocation12 + $0x10] sm:$0xff]
    %v581 = vld [vmem:[#allocation12 + $0x18] sm:$0xff]
    %v582 = vld [vmem:[#allocation12 + $0x20] sm:$0xff]
    %v583 = vld [vmem:[#allocation12 + $0x28] sm:$0xff]
    %v584 = vld [vmem:[#allocation12 + $0x30] sm:$0xff]
    %v585 = vld [vmem:[#allocation12 + $0x38] sm:$0xff]
    %v586 = vld [vmem:[#allocation12 + $0x40] sm:$0xff]
    %v587 = vld [vmem:[#allocation12 + $0x48] sm:$0xff]
    %v588 = vld [vmem:[#allocation12 + $0x50] sm:$0xff]
    %v589 = vld [vmem:[#allocation12 + $0x58] sm:$0xff]
    %v590 = vld [vmem:[#allocation12 + $0x60] sm:$0xff]
    %v591 = vld [vmem:[#allocation12 + $0x68] sm:$0xff]
    %v592 = vld [vmem:[#allocation12 + $0x70] sm:$0xff]
    %v593 = vld [vmem:[#allocation12 + $0x78] sm:$0xff]
    %v594 = vld [vmem:[#allocation3 + $0x1] sm:$0xff]
    %v595 = vld [vmem:[#allocation3 + $0x9] sm:$0xff]
    %v596 = vld [vmem:[#allocation3 + $0x19] sm:$0xff]
    %v597 = vld [vmem:[#allocation3 + $0x21] sm:$0xff]
    %s598 = scalar_lea.vmem [#allocation12], 128
    %v599 = vld [vmem:[%s598] sm:$0xff]
    %v600 = vld [vmem:[%s598 + $0x8] sm:$0xff]
    %v601 = vld [vmem:[%s598 + $0x10] sm:$0xff]
    %v602 = vld [vmem:[%s598 + $0x18] sm:$0xff]
    %v603 = vld [vmem:[%s598 + $0x20] sm:$0xff]
    %v604 = vld [vmem:[%s598 + $0x28] sm:$0xff]
    %v605 = vld [vmem:[%s598 + $0x30] sm:$0xff]
    %v606 = vld [vmem:[%s598 + $0x38] sm:$0xff]
    %v607 = vld [vmem:[%s598 + $0x40] sm:$0xff]
    %v608 = vld [vmem:[%s598 + $0x48] sm:$0xff]
    %v609 = vld [vmem:[%s598 + $0x50] sm:$0xff]
    %v610 = vld [vmem:[%s598 + $0x58] sm:$0xff]
    %v611 = vld [vmem:[%s598 + $0x60] sm:$0xff]
    %v612 = vld [vmem:[%s598 + $0x68] sm:$0xff]
    %v613 = vld [vmem:[%s598 + $0x70] sm:$0xff]
    %v614 = vld [vmem:[%s598 + $0x78] sm:$0xff]
    %615 = vmatprep.subr.mxu0 0.0
    %616 = vmatpush1.msra.mxu0 %v614
    %617 = vmatprep.subr.mxu0 0.0
    %618 = vmatpush1.msra.mxu0 %v613
    %619 = vmatprep.subr.mxu0 0.0
    %620 = vmatpush1.msra.mxu0 %v612
    %621 = vmatprep.subr.mxu0 0.0
    %622 = vmatpush1.msra.mxu0 %v611
    %623 = vmatprep.subr.mxu0 0.0
    %624 = vmatpush1.msra.mxu0 %v610
    %625 = vmatprep.subr.mxu0 0.0
    %626 = vmatpush1.msra.mxu0 %v609
    %627 = vmatprep.subr.mxu0 0.0
    %628 = vmatpush1.msra.mxu0 %v608
    %629 = vmatprep.subr.mxu0 0.0
    %630 = vmatpush1.msra.mxu0 %v607
    %631 = vmatprep.subr.mxu0 0.0
    %632 = vmatpush1.msra.mxu0 %v606
    %633 = vmatprep.subr.mxu0 0.0
    %634 = vmatpush1.msra.mxu0 %v605
    %635 = vmatprep.subr.mxu0 0.0
    %636 = vmatpush1.msra.mxu0 %v604
    %637 = vmatprep.subr.mxu0 0.0
    %638 = vmatpush1.msra.mxu0 %v603
    %639 = vmatprep.subr.mxu0 0.0
    %640 = vmatpush1.msra.mxu0 %v602
    %641 = vmatprep.subr.mxu0 0.0
    %642 = vmatpush1.msra.mxu0 %v601
    %643 = vmatprep.subr.mxu0 0.0
    %644 = vmatpush1.msra.mxu0 %v600
    %645 = vmatprep.subr.mxu0 0.0
    %646 = vmatpush1.msra.mxu0 %v599
    %647 = vmatprep.subr.mxu0 0.0
    %648 = vmatpush2.msra.mxu0 0.0
    %649 = vmatprep.subr.mxu0 0.0
    %650 = vmatpush2.msra.mxu0 0.0
    %651 = vmatprep.subr.mxu0 0.0
    %652 = vmatpush2.msra.mxu0 0.0
    %653 = vmatprep.subr.mxu0 0.0
    %654 = vmatpush2.msra.mxu0 0.0
    %655 = vmatprep.subr.mxu0 0.0
    %656 = vmatpush2.msra.mxu0 0.0
    %657 = vmatprep.subr.mxu0 0.0
    %658 = vmatpush2.msra.mxu0 0.0
    %659 = vmatprep.subr.mxu0 0.0
    %660 = vmatpush2.msra.mxu0 0.0
    %661 = vmatprep.subr.mxu0 0.0
    %662 = vmatpush2.msra.mxu0 0.0
    %663 = vmatprep.subr.mxu0 0.0
    %664 = vmatpush2.msra.mxu0 0.0
    %665 = vmatprep.subr.mxu0 0.0
    %666 = vmatpush2.msra.mxu0 0.0
    %667 = vmatprep.subr.mxu0 0.0
    %668 = vmatpush2.msra.mxu0 0.0
    %669 = vmatprep.subr.mxu0 0.0
    %670 = vmatpush2.msra.mxu0 0.0
    %671 = vmatprep.subr.mxu0 0.0
    %672 = vmatpush2.msra.mxu0 0.0
    %673 = vmatprep.subr.mxu0 0.0
    %674 = vmatpush2.msra.mxu0 0.0
    %675 = vmatprep.subr.mxu0 0.0
    %676 = vmatpush2.msra.mxu0 0.0
    %677 = vmatprep.subr.mxu0 0.0
    %678 = vmatpush2.msra.mxu0 0.0
    %679 = vmatprep.mubr.f32.mxu0 0.0
    %680 = vmatmul.mubr.f32.gmra.mxu0 %v594
    %v681 = vpop.f32.mrf.mxu0
    %v682 = vadd.f32 0.0, %v681
    %v683 = vpop.f32.mrf.mxu0
    %684 = vmatprep.mubr.f32.mxu0 0.0
    %685 = vmatmul.mubr.f32.gmra.mxu0 %v595
    %v686 = vpop.f32.mrf.mxu0
    %v687 = vadd.f32 0.0, %v686
    %v688 = vpop.f32.mrf.mxu0
    %689 = vmatprep.mubr.f32.mxu0 0.0
    %690 = vmatmul.mubr.f32.gmra.mxu0 %v596
    %v691 = vpop.f32.mrf.mxu0
    %v692 = vadd.f32 0.0, %v691
    %v693 = vpop.f32.mrf.mxu0
    %694 = vmatprep.mubr.f32.mxu0 0.0
    %695 = vmatmul.mubr.f32.gmra.mxu0 %v597
    %v696 = vpop.f32.mrf.mxu0
    %v697 = vadd.f32 0.0, %v696
    %v698 = vpop.f32.mrf.mxu0
    %699 = vdwg.mxu0
    %700 = vmatprep.subr.mxu0 0.0
    %701 = vmatpush1.msra.mxu0 %v593
    %702 = vmatprep.subr.mxu0 0.0
    %703 = vmatpush1.msra.mxu0 %v592
    %704 = vmatprep.subr.mxu0 0.0
    %705 = vmatpush1.msra.mxu0 %v591
    %706 = vmatprep.subr.mxu0 0.0
    %707 = vmatpush1.msra.mxu0 %v590
    %708 = vmatprep.subr.mxu0 0.0
    %709 = vmatpush1.msra.mxu0 %v589
    %710 = vmatprep.subr.mxu0 0.0
    %711 = vmatpush1.msra.mxu0 %v588
    %712 = vmatprep.subr.mxu0 0.0
    %713 = vmatpush1.msra.mxu0 %v587
    %714 = vmatprep.subr.mxu0 0.0
    %715 = vmatpush1.msra.mxu0 %v586
    %716 = vmatprep.subr.mxu0 0.0
    %717 = vmatpush1.msra.mxu0 %v585
    %718 = vmatprep.subr.mxu0 0.0
    %719 = vmatpush1.msra.mxu0 %v584
    %720 = vmatprep.subr.mxu0 0.0
    %721 = vmatpush1.msra.mxu0 %v583
    %722 = vmatprep.subr.mxu0 0.0
    %723 = vmatpush1.msra.mxu0 %v582
    %724 = vmatprep.subr.mxu0 0.0
    %725 = vmatpush1.msra.mxu0 %v581
    %726 = vmatprep.subr.mxu0 0.0
    %727 = vmatpush1.msra.mxu0 %v580
    %728 = vmatprep.subr.mxu0 0.0
    %729 = vmatpush1.msra.mxu0 %v579
    %730 = vmatprep.subr.mxu0 0.0
    %731 = vmatpush1.msra.mxu0 %v578
    %732 = vmatprep.subr.mxu0 0.0
    %733 = vmatpush2.msra.mxu0 0.0
    %734 = vmatprep.subr.mxu0 0.0
    %735 = vmatpush2.msra.mxu0 0.0
    %736 = vmatprep.subr.mxu0 0.0
    %737 = vmatpush2.msra.mxu0 0.0
    %738 = vmatprep.subr.mxu0 0.0
    %739 = vmatpush2.msra.mxu0 0.0
    %740 = vmatprep.subr.mxu0 0.0
    %741 = vmatpush2.msra.mxu0 0.0
    %742 = vmatprep.subr.mxu0 0.0
    %743 = vmatpush2.msra.mxu0 0.0
    %744 = vmatprep.subr.mxu0 0.0
    %745 = vmatpush2.msra.mxu0 0.0
    %746 = vmatprep.subr.mxu0 0.0
    %747 = vmatpush2.msra.mxu0 0.0
    %748 = vmatprep.subr.mxu0 0.0
    %749 = vmatpush2.msra.mxu0 0.0
    %750 = vmatprep.subr.mxu0 0.0
    %751 = vmatpush2.msra.mxu0 0.0
    %752 = vmatprep.subr.mxu0 0.0
    %753 = vmatpush2.msra.mxu0 0.0
    %754 = vmatprep.subr.mxu0 0.0
    %755 = vmatpush2.msra.mxu0 0.0
    %756 = vmatprep.subr.mxu0 0.0
    %757 = vmatpush2.msra.mxu0 0.0
    %758 = vmatprep.subr.mxu0 0.0
    %759 = vmatpush2.msra.mxu0 0.0
    %760 = vmatprep.subr.mxu0 0.0
    %761 = vmatpush2.msra.mxu0 0.0
    %762 = vmatprep.subr.mxu0 0.0
    %763 = vmatpush2.msra.mxu0 0.0
    %764 = vmatprep.mubr.f32.mxu0 0.0
    %765 = vmatmul.mubr.f32.gmra.mxu0 %v574
    %v766 = vpop.f32.mrf.mxu0
    %v767 = vadd.f32 %v682, %v766
    %v768 = vpop.f32.mrf.mxu0
    %769 = vmatprep.mubr.f32.mxu0 0.0
    %770 = vmatmul.mubr.f32.gmra.mxu0 %v575
    %v771 = vpop.f32.mrf.mxu0
    %v772 = vadd.f32 %v687, %v771
    %v773 = vpop.f32.mrf.mxu0
    %774 = vmatprep.mubr.f32.mxu0 0.0
    %775 = vmatmul.mubr.f32.gmra.mxu0 %v576
    %v776 = vpop.f32.mrf.mxu0
    %v777 = vadd.f32 %v692, %v776
    %v778 = vpop.f32.mrf.mxu0
    %779 = vmatprep.mubr.f32.mxu0 0.0
    %780 = vmatmul.mubr.f32.gmra.mxu0 %v577
    %v781 = vpop.f32.mrf.mxu0
    %v782 = vadd.f32 %v697, %v781
    %v783 = vpop.f32.mrf.mxu0
    %784 = vdwg.mxu0
    %v785 = vld [vmem:[#allocation3 + $0x2] sm:$0xff]
    %v786 = vld [vmem:[#allocation3 + $0xa] sm:$0xff]
    %v787 = vld [vmem:[#allocation3 + $0x1a] sm:$0xff]
    %v788 = vld [vmem:[#allocation3 + $0x22] sm:$0xff]
    %s789 = scalar_lea.vmem [#allocation12], 256
    %v790 = vld [vmem:[%s789] sm:$0xff]
    %v791 = vld [vmem:[%s789 + $0x8] sm:$0xff]
    %v792 = vld [vmem:[%s789 + $0x10] sm:$0xff]
    %v793 = vld [vmem:[%s789 + $0x18] sm:$0xff]
    %v794 = vld [vmem:[%s789 + $0x20] sm:$0xff]
    %v795 = vld [vmem:[%s789 + $0x28] sm:$0xff]
    %v796 = vld [vmem:[%s789 + $0x30] sm:$0xff]
    %v797 = vld [vmem:[%s789 + $0x38] sm:$0xff]
    %v798 = vld [vmem:[%s789 + $0x40] sm:$0xff]
    %v799 = vld [vmem:[%s789 + $0x48] sm:$0xff]
    %v800 = vld [vmem:[%s789 + $0x50] sm:$0xff]
    %v801 = vld [vmem:[%s789 + $0x58] sm:$0xff]
    %v802 = vld [vmem:[%s789 + $0x60] sm:$0xff]
    %v803 = vld [vmem:[%s789 + $0x68] sm:$0xff]
    %v804 = vld [vmem:[%s789 + $0x70] sm:$0xff]
    %v805 = vld [vmem:[%s789 + $0x78] sm:$0xff]
    %806 = vmatprep.subr.mxu0 0.0
    %807 = vmatpush1.msra.mxu0 %v805
    %808 = vmatprep.subr.mxu0 0.0
    %809 = vmatpush1.msra.mxu0 %v804
    %810 = vmatprep.subr.mxu0 0.0
    %811 = vmatpush1.msra.mxu0 %v803
    %812 = vmatprep.subr.mxu0 0.0
    %813 = vmatpush1.msra.mxu0 %v802
    %814 = vmatprep.subr.mxu0 0.0
    %815 = vmatpush1.msra.mxu0 %v801
    %816 = vmatprep.subr.mxu0 0.0
    %817 = vmatpush1.msra.mxu0 %v800
    %818 = vmatprep.subr.mxu0 0.0
    %819 = vmatpush1.msra.mxu0 %v799
    %820 = vmatprep.subr.mxu0 0.0
    %821 = vmatpush1.msra.mxu0 %v798
    %822 = vmatprep.subr.mxu0 0.0
    %823 = vmatpush1.msra.mxu0 %v797
    %824 = vmatprep.subr.mxu0 0.0
    %825 = vmatpush1.msra.mxu0 %v796
    %826 = vmatprep.subr.mxu0 0.0
    %827 = vmatpush1.msra.mxu0 %v795
    %828 = vmatprep.subr.mxu0 0.0
    %829 = vmatpush1.msra.mxu0 %v794
    %830 = vmatprep.subr.mxu0 0.0
    %831 = vmatpush1.msra.mxu0 %v793
    %832 = vmatprep.subr.mxu0 0.0
    %833 = vmatpush1.msra.mxu0 %v792
    %834 = vmatprep.subr.mxu0 0.0
    %835 = vmatpush1.msra.mxu0 %v791
    %836 = vmatprep.subr.mxu0 0.0
    %837 = vmatpush1.msra.mxu0 %v790
    %838 = vmatprep.subr.mxu0 0.0
    %839 = vmatpush2.msra.mxu0 0.0
    %840 = vmatprep.subr.mxu0 0.0
    %841 = vmatpush2.msra.mxu0 0.0
    %842 = vmatprep.subr.mxu0 0.0
    %843 = vmatpush2.msra.mxu0 0.0
    %844 = vmatprep.subr.mxu0 0.0
    %845 = vmatpush2.msra.mxu0 0.0
    %846 = vmatprep.subr.mxu0 0.0
    %847 = vmatpush2.msra.mxu0 0.0
    %848 = vmatprep.subr.mxu0 0.0
    %849 = vmatpush2.msra.mxu0 0.0
    %850 = vmatprep.subr.mxu0 0.0
    %851 = vmatpush2.msra.mxu0 0.0
    %852 = vmatprep.subr.mxu0 0.0
    %853 = vmatpush2.msra.mxu0 0.0
    %854 = vmatprep.subr.mxu0 0.0
    %855 = vmatpush2.msra.mxu0 0.0
    %856 = vmatprep.subr.mxu0 0.0
    %857 = vmatpush2.msra.mxu0 0.0
    %858 = vmatprep.subr.mxu0 0.0
    %859 = vmatpush2.msra.mxu0 0.0
    %860 = vmatprep.subr.mxu0 0.0
    %861 = vmatpush2.msra.mxu0 0.0
    %862 = vmatprep.subr.mxu0 0.0
    %863 = vmatpush2.msra.mxu0 0.0
    %864 = vmatprep.subr.mxu0 0.0
    %865 = vmatpush2.msra.mxu0 0.0
    %866 = vmatprep.subr.mxu0 0.0
    %867 = vmatpush2.msra.mxu0 0.0
    %868 = vmatprep.subr.mxu0 0.0
    %869 = vmatpush2.msra.mxu0 0.0
    %870 = vmatprep.mubr.f32.mxu0 0.0
    %871 = vmatmul.mubr.f32.gmra.mxu0 %v785
    %v872 = vpop.f32.mrf.mxu0
    %v873 = vadd.f32 0.0, %v872
    %v874 = vpop.f32.mrf.mxu0
    %875 = vmatprep.mubr.f32.mxu0 0.0
    %876 = vmatmul.mubr.f32.gmra.mxu0 %v786
    %v877 = vpop.f32.mrf.mxu0
    %v878 = vadd.f32 0.0, %v877
    %v879 = vpop.f32.mrf.mxu0
    %880 = vmatprep.mubr.f32.mxu0 0.0
    %881 = vmatmul.mubr.f32.gmra.mxu0 %v787
    %v882 = vpop.f32.mrf.mxu0
    %v883 = vadd.f32 0.0, %v882
    %v884 = vpop.f32.mrf.mxu0
    %885 = vmatprep.mubr.f32.mxu0 0.0
    %886 = vmatmul.mubr.f32.gmra.mxu0 %v788
    %v887 = vpop.f32.mrf.mxu0
    %v888 = vadd.f32 0.0, %v887
    %v889 = vpop.f32.mrf.mxu0
    %890 = vdwg.mxu0
    %v891 = vadd.f32 %v767, %v873
    %v892 = vadd.f32 %v772, %v878
    %v893 = vadd.f32 %v777, %v883
    %v894 = vadd.f32 %v782, %v888
    %v895 = vld [vmem:[%s6] sm:$0x1]
    %v897 = vlaneseq
    %v898 = vshrl.u32 %v897, 7
    %v899 = vsub.s32 0, %v898
    %v900 = vrot.slane %v895, %v899
    %v902 = vadd.f32 %v891, %v900
    %v903 = vadd.f32 %v892, %v900
    %v904 = vadd.f32 %v893, %v900
    %v905 = vadd.f32 %v894, %v900
    %v906 = vxor.u32 %v902, 2147483648
    %v907 = vxor.u32 %v903, 2147483648
    %v908 = vxor.u32 %v904, 2147483648
    %v909 = vxor.u32 %v905, 2147483648
    %v910 = vmul.f32 %v906, 1.442695
    %v911 = vpow.pop %v910
    %v912 = vmul.f32 %v907, 1.442695
    %v913 = vpow.pop %v912
    %v914 = vmul.f32 %v908, 1.442695
    %v915 = vpow.pop %v914
    %v916 = vmul.f32 %v909, 1.442695
    %v917 = vpow.pop %v916
    %v918 = vadd.f32 %v911, 1.0
    %v919 = vadd.f32 %v913, 1.0
    %v920 = vadd.f32 %v915, 1.0
    %v921 = vadd.f32 %v917, 1.0
    %v922 = vrcp.pop %v918
    %v923 = vmul.f32 1.0, %v922
    %v924 = vrcp.pop %v919
    %v925 = vmul.f32 1.0, %v924
    %v926 = vrcp.pop %v920
    %v927 = vmul.f32 1.0, %v926
    %v928 = vrcp.pop %v921
    %v929 = vmul.f32 1.0, %v928
    %v930 = vmul.f32 %v902, %v923
    %v931 = vmul.f32 %v903, %v925
    %v932 = vmul.f32 %v904, %v927
    %v933 = vmul.f32 %v905, %v929
    %934 = vst [vmem:[#allocation13] sm:$0xff] %v930
    %935 = vst [vmem:[#allocation13 + $0x8] sm:$0xff] %v931
    %936 = vst [vmem:[#allocation13 + $0x10] sm:$0xff] %v932
    %937 = vst [vmem:[#allocation13 + $0x18] sm:$0xff] %v933
    // Predicated region
    $region50: #{tpu_custom_call.1} parent=1 // pred_check
      _
    $region51: #{tpu_custom_call.1} parent=1 // pred_check_branch
      %939 = sbr.rel (0) target = $region53
    $region52: #{tpu_custom_call.1} parent=1 // pred_region
      %s941 = ssub.s32 512, 512
      %942 = vsyncadd [#allocation6], %s941
      %s943 = sshll.u32 [#allocation13], 4
      %s944 = int_to_ptr.vmem [resolvable:$true] %s943
      %949 = dma.vmem_to_hbm [thread:$0]  %s944, 512, %s7, [#allocation6], 128, 128, 8
    $region53: #{tpu_custom_call.1} parent=1 // pred_fallthru
      _
    // Predicated region
    $region54: #{tpu_custom_call.1} parent=1 // pred_check
      _
    $region55: #{tpu_custom_call.1} parent=1 // pred_check_branch
      %951 = sbr.rel (0) target = $region57
    $region56: #{tpu_custom_call.1} parent=1 // pred_region
      %952 = dma.done [#allocation6], 512
    $region57: #{tpu_custom_call.1} parent=1 // pred_fallthru
      _
    %953 = vsyncpa [#allocation5], 1
    %954 = vsyncpa [#allocation8], 1
    %955 = vsyncpa [#allocation11], 1
    %956 = vsyncpa [#allocation6], 1

</llo_original>
